<compile_context>
chip_gen: v5e
topology: v5e:2x2
jax: 0.10.0
libtpu: 0.0.40
codegen_flags: <defaults>
</compile_context>

<pallas_src>
import jax
import jax.numpy as jnp
from jax.experimental import pallas as pl
from jax.experimental.pallas import tpu as pltpu

_LANES = 128  # lane (fast) axis width


def _augment_kernel(x_ref, o_ref):
    """x_ref/o_ref: (tile_rows, 128) VMEM tiles. Single write path."""
    # TODO(synk): BaseAugmentation._apply_augumentation raises NotImplementedError
    # in the reference module; subclasses replace this identity copy with their
    # real augmentation compute fused into this same streaming pass (the HBM
    # roofline leaves ~10-20 VPU ops/element of free headroom).  A production
    # base class could skip this launch entirely since it is a pure copy.
    o_ref[...] = x_ref[...]


def _round_up(x, m):
    return ((x + m - 1) // m) * m


def _per_buffer_budget_bytes():
    """VMEM budget per pipeline buffer (in + out, each double-buffered)."""
    try:
        kind = jax.devices()[0].device_kind.lower()
    except Exception:  # pragma: no cover - defensive
        kind = ""
    if "v6" in kind or "v7" in kind:
        return 4 * 1024 * 1024   # 4 MiB/buffer -> 16 MiB total, inside 32 MiB scoped default
    return 2 * 1024 * 1024       # 2 MiB/buffer -> 8 MiB total, inside v5e's 16 MiB default


def _apply_augmentation_pallas(recording):
    """Streaming, lane-dense, tiled pass over the recording ("apply" branch)."""
    orig_shape = recording.shape
    dtype = recording.dtype
    itemsize = jnp.dtype(dtype).itemsize

    # dtype-aware sublane granularity: 8 (f32) / 16 (bf16) / 32 (int8/fp8).
    sublanes = max(8, 32 // itemsize)

    flat = recording.reshape(-1)
    n = flat.shape[0]

    # Lane-dense slab: (rows, 128) with rows rounded up only to the sublane
    # granularity (NOT to tile_rows); Pallas handles the partial final block.
    rows = _round_up(pl.cdiv(n, _LANES), sublanes)
    padded = rows * _LANES

    # Byte-budgeted tile size (same VMEM footprint across dtypes).
    budget = _per_buffer_budget_bytes()
    tile_rows = max(sublanes, (budget // (_LANES * itemsize)) // sublanes * sublanes)
    tile_rows = min(tile_rows, rows)

    # Guarantee >= 2 grid steps when possible so both v7x TensorCores stream.
    if tile_rows >= rows and rows >= 2 * sublanes:
        tile_rows = _round_up(pl.cdiv(rows, 2), sublanes)

    grid = pl.cdiv(rows, tile_rows)

    needs_pad = padded != n
    if needs_pad:
        # Fallback only when n isn't a multiple of lane*sublane; the pad is
        # < sublanes*128 elements but still costs one extra XLA pass.
        flat = jnp.pad(flat, (0, padded - n))
    x2d = flat.reshape(rows, _LANES)

    out2d = pl.pallas_call(
        _augment_kernel,
        out_shape=jax.ShapeDtypeStruct((rows, _LANES), dtype),
        grid=(grid,),
        in_specs=[pl.BlockSpec((tile_rows, _LANES), lambda i: (i, 0))],
        out_specs=pl.BlockSpec((tile_rows, _LANES), lambda i: (i, 0)),
        input_output_aliases={0: 0},  # recording -> output (in-place friendly)
        compiler_params=pltpu.CompilerParams(
            dimension_semantics=("parallel",),
        ),
    )(x2d)

    out_flat = out2d.reshape(-1)
    if needs_pad:
        out_flat = out_flat[:n]
    return out_flat.reshape(orig_shape)


def base_augmentation_forward(recording, key, p):
    """recording: (B, T) float array; key: jax PRNG key; p: python float (static)."""
    # Endpoints exactly match torch.bernoulli semantics.
    # NOTE: at p==0 / p==1 no Bernoulli draw is made, so RNG-stream consumption
    # differs from the torch module (documented semantic divergence).
    if p <= 0.0:
        return recording
    if p >= 1.0:
        return _apply_augmentation_pallas(recording)

    # One Bernoulli(p) draw per forward call, outside the kernel; with
    # probability (1 - p) the kernel (and all its DMAs) is skipped entirely.
    should_apply = jax.random.bernoulli(key, p)
    return jax.lax.cond(
        should_apply,
        _apply_augmentation_pallas,
        lambda r: r,
        recording,
    )


class BaseAugmentation:
    """JAX/Pallas mirror of the torch BaseAugmentation module."""

    def __init__(self, p, sample_rate):
        self._p = float(p)
        self._sample_rate = sample_rate

    def forward(self, recording, key):
        return base_augmentation_forward(recording, key, self._p)

    __call__ = forward


if __name__ == "__main__":
    key = jax.random.PRNGKey(0)
    k_data, k_bern = jax.random.split(key)

    # Small, forward-implied shapes: batch=2 waveforms, 1024 samples each.
    B, T = 2, 1024
    sample_rate = 16000
    recording = jax.random.normal(k_data, (B, T), dtype=jnp.float32)

    # p=1.0 forces the Pallas "apply" path deterministically.
    out_apply = BaseAugmentation(p=1.0, sample_rate=sample_rate)(recording, k_bern)
    out_apply = jax.block_until_ready(out_apply)

    # p=0.0 forces the skip path.
    out_skip = BaseAugmentation(p=0.0, sample_rate=sample_rate)(recording, k_bern)
    out_skip = jax.block_until_ready(out_skip)

    # p=0.5 exercises the random lax.cond gate.
    out_rand = BaseAugmentation(p=0.5, sample_rate=sample_rate)(recording, k_bern)
    out_rand = jax.block_until_ready(out_rand)

    # Also exercise a shape whose flattened length is NOT a multiple of 1024
    # (partial final block handled by Pallas, not by wrapper round-up-to-tile).
    rec_odd = jax.random.normal(k_data, (3, 1000), dtype=jnp.float32)
    out_odd = BaseAugmentation(p=1.0, sample_rate=sample_rate)(rec_odd, k_bern)
    out_odd = jax.block_until_ready(out_odd)
    assert out_odd.shape == rec_odd.shape and bool(jnp.allclose(out_odd, rec_odd))

    # Base class has no real augmentation, so every branch is identity:
    for out in (out_apply, out_skip, out_rand):
        assert out.shape == recording.shape and out.dtype == recording.dtype
        assert bool(jnp.allclose(out, recording))

    print("KERNEL_OK")
</pallas_src>

<mosaic_0001>
module attributes {stable_mosaic.version = 11 : i64} {
  func.func @_augment_kernel(%arg0: i32, %arg1: memref<8x128xf32, #tpu.memory_space<vmem>>, %arg2: memref<8x128xf32, #tpu.memory_space<vmem>>) attributes {dimension_semantics = [#tpu.dimension_semantics<parallel>], iteration_bounds = array<i64: 2>, scalar_prefetch = 0 : i64, scratch_operands = 0 : i64, tpu.core_type = #tpu.core_type<tc>, window_params = [{transform_indices = @transform_0, window_bounds = array<i64: 8, 128>}, {transform_indices = @transform_1, window_bounds = array<i64: 8, 128>}]} {
    %c0 = arith.constant 0 : index
    %c0_0 = arith.constant 0 : index
    %0 = vector.load %arg1[%c0, %c0_0] : memref<8x128xf32, #tpu.memory_space<vmem>>, vector<8x128xf32>
    %c0_1 = arith.constant 0 : index
    %c0_2 = arith.constant 0 : index
    %1 = vector.load %arg2[%c0_1, %c0_2] : memref<8x128xf32, #tpu.memory_space<vmem>>, vector<8x128xf32>
    tpu.vector_store %arg2[%c0_1, %c0_2], %0 {strides = array<i32>} : memref<8x128xf32, #tpu.memory_space<vmem>>, vector<8x128xf32>,
    return
  }
  func.func @transform_0(%arg0: i32) -> (i32, i32) {
    %c0_i32 = arith.constant 0 : i32
    %c0_i32_0 = arith.constant 0 : i32
    return %arg0, %c0_i32 : i32, i32
  }
  func.func @transform_1(%arg0: i32) -> (i32, i32) {
    %c0_i32 = arith.constant 0 : i32
    %c0_i32_0 = arith.constant 0 : i32
    return %arg0, %c0_i32 : i32, i32
  }
}

</mosaic_0001>

<llo_original>
// kernel: tpu_custom_call.1
$region0: #{tpu_custom_call.1}
  #allocation0 [shape = 'u32[]', space=smem, size = 0x4, offset = 0x4, fixed_abs, tag = 'smem constant byte address 0x4 - core index']
  #allocation1 [shape = 'u32[72,128]{1,0:T(1,128)}', space=vmem, size = 0x9000, scoped, tag = 'internal scratch']
  %s0 = inlined_call_operand.hbm [shape: f32[16,128], index: 0, kind: input, shape index: {}, may-alias: {0,1}]
  %s1 = inlined_call_operand.hbm [shape: f32[16,128], index: 1, kind: output, shape index: {}, may-alias: {0,1}]
  %s2 = sld [smem:[#allocation0]]
  $region41: #{tpu_custom_call.1} parent=0
    _
  %s4 = ssub.s32 1, %s2
  %s5 = scalar_select 0, %s4, %s2
  $region1: #{tpu_custom_call.1} parent=0
    #allocation2 [shape = 'u8[8192]{0}', space=vmem, size = 0x2000, scoped, tag = 'input window, operand 0']
    #allocation3 [shape = 's32[2]{0}', space=sflag, size = 0x8, scoped, tag = 'scoped memory for tpu_custom_call.1']
    #allocation4 [shape = 's32[2]{0}', space=sflag, size = 0x8, scoped, tag = 'scoped memory for tpu_custom_call.1']
    #allocation5 [shape = 'u8[8192]{0}', space=vmem, size = 0x2000, scoped, tag = 'output window, operand 0']
    %6 = vsyncpa [#allocation3], 0
    %s7 = scalar_lea.sflag [#allocation3], 1
    %8 = vsyncpa %s7, 0
    %9 = vsyncpa [#allocation4], 0
    %s10 = scalar_lea.sflag [#allocation4], 1
    %11 = vsyncpa %s10, 0
    loop: start=0, step=1, limit=4
    $region2: #{tpu_custom_call.1} parent=1 // loop_pre_header
      _
    $region3: #{tpu_custom_call.1} parent=1 // loop_header
      %s13 = sphi 0, %s17
      %p14 = scmp.ge.s32.totalorder %s13, 4
      %s23 = sphi 0, %s25
      %s26 = sphi 0, %s23
      %s27 = sphi 0, %s26
      %s43 = sphi 0, %s27
      %s49 = sphi 0, %s51
      %s52 = sphi 0, %s49
      %s53 = sphi 0, %s52
      %s69 = sphi 0, %s53
    $region4: #{tpu_custom_call.1} parent=1 // loop_header_branch
      %16 = sbr.rel (%p14) target = $region8
    $region5: #{tpu_custom_call.1} parent=1 // loop_body
      %s18 = ssub.s32 %s13, 1
      %s19 = ssub.s32 %s13, 2
      %s20 = sadd.s32 %s13, 1
      %s21 = ssub.s32 %s13, %s20
      %p22 = scmp.eq.s32.totalorder %s21, 0
      %s24 = sadd.s32 %s23, 1
      %s25 = scalar_select %p22, %s23, %s24
      %p28 = pneg %p22
      %p29 = scmp.eq.s32.totalorder %s13, 1
      %p30 = por %p28, %p29
      %p31 = scmp.ne.s32.totalorder %s23, %s26
      %p32 = scmp.eq.s32.totalorder %s13, 0
      %p33 = por %p31, %p32
      %p34 = scmp.ne.s32.totalorder %s23, %s26
      %p35 = scmp.eq.s32.totalorder %s18, 1
      %p36 = por %p34, %p35
      %p37 = scmp.ne.s32.totalorder %s26, %s27
      %p38 = scmp.eq.s32.totalorder %s18, 0
      %p39 = por %p37, %p38
      %p40 = scmp.ne.s32.totalorder %s26, %s27
      %p41 = scmp.eq.s32.totalorder %s19, 1
      %p42 = por %p40, %p41
      %p44 = scmp.ne.s32.totalorder %s27, %s43
      %p45 = scmp.eq.s32.totalorder %s19, 0
      %p46 = por %p44, %p45
      %s47 = ssub.s32 %s13, %s20
      %p48 = scmp.eq.s32.totalorder %s47, 0
      %s50 = sadd.s32 %s49, 1
      %s51 = scalar_select %p48, %s49, %s50
      %p54 = pneg %p48
      %p55 = scmp.eq.s32.totalorder %s13, 1
      %p56 = por %p54, %p55
      %p57 = scmp.ne.s32.totalorder %s49, %s52
      %p58 = scmp.eq.s32.totalorder %s13, 0
      %p59 = por %p57, %p58
      %p60 = scmp.ne.s32.totalorder %s49, %s52
      %p61 = scmp.eq.s32.totalorder %s18, 1
      %p62 = por %p60, %p61
      %p63 = scmp.ne.s32.totalorder %s52, %s53
      %p64 = scmp.eq.s32.totalorder %s18, 0
      %p65 = por %p63, %p64
      %p66 = scmp.ne.s32.totalorder %s52, %s53
      %p67 = scmp.eq.s32.totalorder %s19, 1
      %p68 = por %p66, %p67
      %p70 = scmp.ne.s32.totalorder %s53, %s69
      %p71 = scmp.eq.s32.totalorder %s19, 0
      %p72 = por %p70, %p71
      %p73 = scmp.le.s32.totalorder 1, %s13
      %p74 = scmp.lt.s32.totalorder %s13, 3
      %p75 = pnand %p73, %p74
      %p76 = pneg %p75
      // Predicated region
      $region9: #{tpu_custom_call.1} parent=5 // pred_check
        _
      $region10: #{tpu_custom_call.1} parent=5 // pred_check_branch
        %78 = sbr.rel (%p75) target = $region12
      $region11: #{tpu_custom_call.1} parent=5 // pred_region
        %s79 = ssub.s32 %s13, 1
      $region12: #{tpu_custom_call.1} parent=5 // pred_fallthru
        _
      %p80 = scmp.lt.s32.totalorder %s13, 2
      // Predicated region
      $region13: #{tpu_custom_call.1} parent=5 // pred_check
        %p81 = pneg %p80
      $region14: #{tpu_custom_call.1} parent=5 // pred_check_branch
        %83 = sbr.rel (%p81) target = $region16
      $region15: #{tpu_custom_call.1} parent=5 // pred_region
        // Predicated region
        $region17: #{tpu_custom_call.1} parent=15 // pred_check
          %p84 = pneg %p33
        $region18: #{tpu_custom_call.1} parent=15 // pred_check_branch
          %86 = sbr.rel (%p84) target = $region20
        $region19: #{tpu_custom_call.1} parent=15 // pred_region
          %s87 = sand.u32 %s23, 1
          %s88 = scalar_lea.sflag [#allocation3], %s87
          %s89 = sand.u32 %s23, 1
          %s90 = smul.addr %s89, 8
          %s91 = scalar_lea.vmem [#allocation2], %s90
          %93 = vsyncadd %s88, 0
          %s94 = smul.addr %s13, 8
          %s95 = scalar_lea.hbm %s0, %s94
          %s97 = sshll.u32 %s95, 4
          %s98 = int_to_ptr.hbm [resolvable:$true] %s97
          %s99 = sshll.u32 %s91, 4
          %s100 = int_to_ptr.vmem [resolvable:$true] %s99
          %102 = dma.hbm_to_vmem [thread:$0]  %s98, 128, %s100, %s88
        $region20: #{tpu_custom_call.1} parent=15 // pred_fallthru
          _
      $region16: #{tpu_custom_call.1} parent=5 // pred_fallthru
        _
      %p103 = scmp.le.s32.totalorder 1, %s13
      %p104 = scmp.lt.s32.totalorder %s13, 3
      %p105 = pnand %p103, %p104
      %p106 = pneg %p105
      // Predicated region
      $region21: #{tpu_custom_call.1} parent=5 // pred_check
        _
      $region22: #{tpu_custom_call.1} parent=5 // pred_check_branch
        %108 = sbr.rel (%p105) target = $region24
      $region23: #{tpu_custom_call.1} parent=5 // pred_region
        %s109 = ssub.s32 %s13, 1
        %s110 = sand.u32 %s26, 1
        %s111 = scalar_lea.sflag [#allocation3], %s110
        %s112 = sand.u32 %s26, 1
        %s113 = smul.addr %s112, 8
        %s114 = scalar_lea.vmem [#allocation2], %s113
        // Predicated region
        $region25: #{tpu_custom_call.1} parent=23 // pred_check
          %p115 = pneg %p39
        $region26: #{tpu_custom_call.1} parent=23 // pred_check_branch
          %117 = sbr.rel (%p115) target = $region28
        $region27: #{tpu_custom_call.1} parent=23 // pred_region
          %119 = dma.done %s111, 128
        $region28: #{tpu_custom_call.1} parent=23 // pred_fallthru
          _
        %s120 = sand.u32 %s26, 1
        %s121 = scalar_lea.sflag [#allocation3], %s120
        %s122 = sand.u32 %s26, 1
        %s123 = smul.addr %s122, 8
        %s124 = scalar_lea.vmem [#allocation2], %s123
        %p125 = pneg %p39
        %p126 = pneg %p36
        %p127 = pneg %p65
        %p128 = pneg %p62
        %s129 = sand.u32 %s52, 1
        %s130 = scalar_lea.sflag [#allocation4], %s129
        %s131 = sand.u32 %s52, 1
        %s132 = smul.addr %s131, 8
        %s133 = scalar_lea.vmem [#allocation5], %s132
        %v134 = vld [vmem:[%s114] sm:$0xff]
        %135 = vst [vmem:[%s133] sm:$0xff] %v134
        %s136 = sand.u32 %s52, 1
        %s137 = scalar_lea.sflag [#allocation4], %s136
        %s138 = sand.u32 %s52, 1
        %s139 = smul.addr %s138, 8
        %s140 = scalar_lea.vmem [#allocation5], %s139
        // Predicated region
        $region29: #{tpu_custom_call.1} parent=23 // pred_check
          %p141 = pneg %p62
        $region30: #{tpu_custom_call.1} parent=23 // pred_check_branch
          %143 = sbr.rel (%p141) target = $region32
        $region31: #{tpu_custom_call.1} parent=23 // pred_region
          %145 = vsyncadd %s137, 0
          %s146 = smul.addr %s18, 8
          %s147 = scalar_lea.hbm %s1, %s146
          %s149 = sshll.u32 %s140, 4
          %s150 = int_to_ptr.vmem [resolvable:$true] %s149
          %s151 = sshll.u32 %s147, 4
          %s152 = int_to_ptr.hbm [resolvable:$true] %s151
          %154 = dma.vmem_to_hbm [thread:$0]  %s150, 128, %s152, %s137
        $region32: #{tpu_custom_call.1} parent=23 // pred_fallthru
          _
      $region24: #{tpu_custom_call.1} parent=5 // pred_fallthru
        _
      %p155 = scmp.le.s32.totalorder 2, %s13
      // Predicated region
      $region33: #{tpu_custom_call.1} parent=5 // pred_check
        %p156 = pneg %p155
      $region34: #{tpu_custom_call.1} parent=5 // pred_check_branch
        %158 = sbr.rel (%p156) target = $region36
      $region35: #{tpu_custom_call.1} parent=5 // pred_region
        %s159 = ssub.s32 %s13, 2
        // Predicated region
        $region37: #{tpu_custom_call.1} parent=35 // pred_check
          %p160 = pneg %p68
        $region38: #{tpu_custom_call.1} parent=35 // pred_check_branch
          %162 = sbr.rel (%p160) target = $region40
        $region39: #{tpu_custom_call.1} parent=35 // pred_region
          %s163 = sand.u32 %s53, 1
          %s164 = scalar_lea.sflag [#allocation4], %s163
          %s165 = sand.u32 %s53, 1
          %s166 = smul.addr %s165, 8
          %s167 = scalar_lea.vmem [#allocation5], %s166
          %169 = dma.done %s164, 128
        $region40: #{tpu_custom_call.1} parent=35 // pred_fallthru
          _
      $region36: #{tpu_custom_call.1} parent=5 // pred_fallthru
        _
    $region6: #{tpu_custom_call.1} parent=1 // loop_footer
      %s17 = sadd.s32 1, %s13
    $region7: #{tpu_custom_call.1} parent=1 // loop_footer_branch
      %12 = sbr.rel target = $region3
    $region8: #{tpu_custom_call.1} parent=1 // loop_exit
      _
    %170 = vsyncpa [#allocation3], 1
    %s171 = scalar_lea.sflag [#allocation3], 1
    %172 = vsyncpa %s171, 1
    %173 = vsyncpa [#allocation4], 1
    %s174 = scalar_lea.sflag [#allocation4], 1
    %175 = vsyncpa %s174, 1

</llo_original>
